<compile_context>
chip_gen: v5e
topology: v5e:2x2
jax: 0.10.0
libtpu: 0.0.40
codegen_flags: <defaults>
</compile_context>

<pallas_src>
import functools
import math

import jax
import jax.numpy as jnp
from jax.experimental import pallas as pl
from jax.experimental.pallas import tpu as pltpu


def _round_up(x, m):
    return ((x + m - 1) // m) * m


# Above the 16/32 MiB scoped defaults, but with headroom on v7x's 64 MiB VMEM.
_VMEM_LIMIT = 40 * 1024 * 1024


# --------------------------- Linear: x @ w (+ b) -----------------------------

def _linear_kernel(*refs, has_bias):
    if has_bias:
        x_ref, w_ref, b_ref, o_ref, acc_ref = refs
    else:
        x_ref, w_ref, o_ref, acc_ref = refs
        b_ref = None
    k = pl.program_id(2)

    @pl.when(k == 0)
    def _init():
        acc_ref[...] = jnp.zeros_like(acc_ref)

    # bf16 MXU operands, f32 accumulation.
    acc_ref[...] += jnp.dot(
        x_ref[...].astype(jnp.bfloat16),
        w_ref[...].astype(jnp.bfloat16),
        preferred_element_type=jnp.float32)

    @pl.when(k == pl.num_programs(2) - 1)
    def _finalize():
        y = acc_ref[...]
        if b_ref is not None:
            y = y + b_ref[...]
        o_ref[...] = y.astype(o_ref.dtype)


def pallas_linear(x2d, w, b=None, *, tile_m=256, tile_n=512, tile_k=512):
    """x2d: (rows, K) @ w: (K, N) (+ b) -> (rows, N), tiled over rows, N and K."""
    rows, K = x2d.shape
    K_w, N = w.shape
    assert K == K_w
    has_bias = b is not None

    # Row tile: as large as practical, 8-aligned; ragged rows zero-padded.
    tm = _round_up(rows, 8) if rows <= tile_m else tile_m
    rows_pad = _round_up(rows, tm)
    # Contraction tile: full K when small (VMEM-safe), else 128-aligned chunks.
    tk = K if K <= tile_k else tile_k
    k_pad = _round_up(K, tk)
    # Output-feature tile: full N when small, else lane-dense tile_n chunks.
    tn = N if N <= tile_n else tile_n
    n_pad = _round_up(N, tn)

    x_p = x2d
    if (rows_pad, k_pad) != (rows, K):
        x_p = jnp.pad(x2d, ((0, rows_pad - rows), (0, k_pad - K)))
    w_p = w
    if (k_pad, n_pad) != (K, N):
        w_p = jnp.pad(w, ((0, k_pad - K), (0, n_pad - N)))

    operands = [x_p, w_p]
    # Grid (n_tiles, row_tiles, k_tiles): k innermost (reduction, 'arbitrary');
    # when k_tiles == 1 the weight block index is constant across the inner
    # row sweep, so Pallas keeps it resident (no per-row-tile re-stream).
    in_specs = [
        pl.BlockSpec((tm, tk), lambda j, i, k: (i, k)),
        pl.BlockSpec((tk, tn), lambda j, i, k: (k, j)),
    ]
    if has_bias:
        b_p = b.reshape(1, N)
        if n_pad != N:
            b_p = jnp.pad(b_p, ((0, 0), (0, n_pad - N)))
        operands.append(b_p)
        in_specs.append(pl.BlockSpec((1, tn), lambda j, i, k: (0, j)))

    n_t, m_t, k_t = n_pad // tn, rows_pad // tm, k_pad // tk
    grid = (n_t, m_t, k_t)
    cost = pl.CostEstimate(
        flops=2 * rows_pad * k_pad * n_pad,
        transcendentals=0,
        bytes_accessed=4 * (n_t * rows_pad * k_pad      # x re-read per N tile
                            + m_t * k_pad * n_pad       # w re-read per row tile
                            + rows_pad * n_pad          # output
                            + (m_t * n_pad if has_bias else 0)),
    )

    out = pl.pallas_call(
        functools.partial(_linear_kernel, has_bias=has_bias),
        out_shape=jax.ShapeDtypeStruct((rows_pad, n_pad), x2d.dtype),
        grid_spec=pltpu.PrefetchScalarGridSpec(
            num_scalar_prefetch=0,
            grid=grid,
            in_specs=in_specs,
            out_specs=pl.BlockSpec((tm, tn), lambda j, i, k: (i, j)),
            scratch_shapes=[pltpu.VMEM((tm, tn), jnp.float32)],
        ),
        compiler_params=pltpu.CompilerParams(
            dimension_semantics=("parallel", "parallel", "arbitrary"),
            vmem_limit_bytes=_VMEM_LIMIT,
        ),
        cost_estimate=cost,
    )(*operands)
    if (rows_pad, n_pad) != (rows, N):
        out = out[:rows, :N]
    return out


# ----------------- Multi-head attention core (flash-style) ------------------
# Operates directly on the packed QKV-projection rows (B, N, 3*H*D):
#   columns [0, HD)      -> q  (head-major)
#   columns [HD, 2HD)    -> k
#   columns [2HD, 3HD)   -> v
# All heads are processed per grid step; output is written in (B, N, H*D)
# layout ('b n (h d)'), so no transposes are needed around the kernel.

def _mha_kernel(q_ref, kv_ref, o_ref, m_sc, l_sc, acc_sc,
                *, num_heads, dim_head, scale, valid_n, block_k, mask_needed):
    ki = pl.program_id(2)
    inner = num_heads * dim_head

    @pl.when(ki == 0)
    def _init():
        m_sc[...] = jnp.full(m_sc.shape, -jnp.inf, dtype=jnp.float32)
        l_sc[...] = jnp.zeros(l_sc.shape, dtype=jnp.float32)
        acc_sc[...] = jnp.zeros(acc_sc.shape, dtype=jnp.float32)

    if mask_needed:
        # Padding only ever lives in the last kv tile; elsewhere this is all 0.
        col = ki * block_k + jax.lax.broadcasted_iota(jnp.int32, (1, block_k), 1)
        neg = jnp.where(col < valid_n, jnp.float32(0.0), jnp.float32(-1e30))
    else:
        neg = None

    for h in range(num_heads):
        lo = h * dim_head
        hi = lo + dim_head
        # Pre-scale q once (f32), cast MXU operands to bf16, accumulate in f32.
        q_h = (q_ref[:, lo:hi] * scale).astype(jnp.bfloat16)              # (tq, D)
        k_h = kv_ref[:, inner + lo:inner + hi].astype(jnp.bfloat16)       # (tk, D)
        v_h = kv_ref[:, 2 * inner + lo:2 * inner + hi].astype(jnp.bfloat16)

        # s = q @ k^T (contract over D, no materialized transpose), f32.
        s = jax.lax.dot_general(q_h, k_h, (((1,), (1,)), ((), ())),
                                preferred_element_type=jnp.float32)        # (tq, tk)
        if neg is not None:
            s = s + neg

        m_prev = m_sc[:, h:h + 1]                                          # (tq, 1)
        m_new = jnp.maximum(m_prev, s.max(axis=-1, keepdims=True))
        alpha = jnp.exp(m_prev - m_new)
        p = jnp.exp(s - m_new)                                             # (tq, tk)
        l_sc[:, h:h + 1] = alpha * l_sc[:, h:h + 1] + p.sum(axis=-1, keepdims=True)
        pv = jnp.dot(p.astype(jnp.bfloat16), v_h,
                     preferred_element_type=jnp.float32)                   # (tq, D)
        acc_sc[:, lo:hi] = alpha * acc_sc[:, lo:hi] + pv
        m_sc[:, h:h + 1] = m_new

    @pl.when(ki == pl.num_programs(2) - 1)
    def _finalize():
        for h in range(num_heads):
            lo = h * dim_head
            hi = lo + dim_head
            inv = pl.reciprocal(l_sc[:, h:h + 1], approx=True)             # EUP
            o_ref[:, lo:hi] = (acc_sc[:, lo:hi] * inv).astype(o_ref.dtype)


def pallas_mha_fused(qkv, *, num_heads, dim_head, scale, tile_seq=256):
    """qkv: (B, N, 3*H*D) packed projection rows -> attention out (B, N, H*D)."""
    B, N, C = qkv.shape
    inner = num_heads * dim_head
    assert C == 3 * inner

    t = _round_up(N, 8) if N <= tile_seq else tile_seq
    n_pad = _round_up(N, t)
    qkv_p = qkv
    if n_pad != N:
        qkv_p = jnp.pad(qkv, ((0, 0), (0, n_pad - N), (0, 0)))
    n_q = n_pad // t
    n_kv = n_pad // t
    grid = (B, n_q, n_kv)   # leading B is 'parallel' -> feeds both v7x TCs
    mask_needed = n_pad != N

    kernel = functools.partial(
        _mha_kernel, num_heads=num_heads, dim_head=dim_head, scale=scale,
        valid_n=N, block_k=t, mask_needed=mask_needed)

    cost = pl.CostEstimate(
        flops=4 * B * num_heads * n_pad * n_pad * dim_head,
        transcendentals=B * num_heads * n_pad * n_pad,
        bytes_accessed=4 * (B * n_q * n_kv * 2 * t * C    # q-rows + kv-rows per step
                            + B * n_pad * inner),          # output
    )

    out = pl.pallas_call(
        kernel,
        out_shape=jax.ShapeDtypeStruct((B, n_pad, inner), qkv.dtype),
        grid_spec=pltpu.PrefetchScalarGridSpec(
            num_scalar_prefetch=0,
            grid=grid,
            in_specs=[
                pl.BlockSpec((None, t, C), lambda b, qi, ki: (b, qi, 0)),  # q rows
                pl.BlockSpec((None, t, C), lambda b, qi, ki: (b, ki, 0)),  # kv rows
            ],
            out_specs=pl.BlockSpec((None, t, inner), lambda b, qi, ki: (b, qi, 0)),
            scratch_shapes=[
                pltpu.VMEM((t, num_heads), jnp.float32),   # running max (per head)
                pltpu.VMEM((t, num_heads), jnp.float32),   # running denom
                pltpu.VMEM((t, inner), jnp.float32),       # output accumulator
            ],
        ),
        compiler_params=pltpu.CompilerParams(
            dimension_semantics=("parallel", "parallel", "arbitrary"),
            vmem_limit_bytes=_VMEM_LIMIT,
        ),
        cost_estimate=cost,
    )(qkv_p, qkv_p)
    if n_pad != N:
        out = out[:, :N, :]
    return out


# --------------------------- Full Attention forward -------------------------

def attention_forward(x, w_qkv, w_out, b_out, *, num_heads, dim_head):
    """Equivalent to Attention.forward(x, attn_mask=0) with dropout=0."""
    B, N, dim = x.shape
    inner = num_heads * dim_head
    project_out = not (num_heads == 1 and dim_head == dim)
    scale = dim_head ** (-0.5)
    rows = B * N

    x2d = x.reshape(rows, dim)
    qkv = pallas_linear(x2d, w_qkv, None)              # (rows, 3*inner), no bias
    qkv = qkv.reshape(B, N, 3 * inner)                 # free reshape, no transpose

    o = pallas_mha_fused(qkv, num_heads=num_heads, dim_head=dim_head,
                         scale=scale)                  # (B, N, inner) = 'b n (h d)'

    if project_out:
        out = pallas_linear(o.reshape(rows, inner), w_out, b_out)
        return out.reshape(B, N, dim)
    return o


# ------------------------------ Pure-JAX reference ---------------------------

def reference_attention(x, w_qkv, w_out, b_out, *, num_heads, dim_head):
    B, N, dim = x.shape
    inner = num_heads * dim_head
    scale = dim_head ** (-0.5)
    qkv = x @ w_qkv
    q, k, v = jnp.split(qkv, 3, axis=-1)

    def split_heads(t):
        return t.reshape(B, N, num_heads, dim_head).transpose(0, 2, 1, 3)

    q, k, v = split_heads(q), split_heads(k), split_heads(v)
    dots = jnp.einsum('bhid,bhjd->bhij', q, k) * scale
    attn = jax.nn.softmax(dots, axis=-1)
    out = jnp.einsum('bhij,bhjd->bhid', attn, v)
    out = out.transpose(0, 2, 1, 3).reshape(B, N, inner)
    if not (num_heads == 1 and dim_head == dim):
        out = out @ w_out + b_out
    return out


if __name__ == "__main__":
    # Small shapes consistent with the module.
    B, N, dim = 2, 8, 32
    num_heads, dim_head = 4, 16
    inner = num_heads * dim_head

    key = jax.random.PRNGKey(0)
    kx, kq, kw, kb = jax.random.split(key, 4)
    x = jax.random.normal(kx, (B, N, dim), dtype=jnp.float32)
    # Deterministic nn.Linear-like uniform init.
    lim_qkv = 1.0 / math.sqrt(dim)
    lim_out = 1.0 / math.sqrt(inner)
    w_qkv = jax.random.uniform(kq, (dim, 3 * inner),
                               minval=-lim_qkv, maxval=lim_qkv, dtype=jnp.float32)
    w_out = jax.random.uniform(kw, (inner, dim),
                               minval=-lim_out, maxval=lim_out, dtype=jnp.float32)
    b_out = jax.random.uniform(kb, (dim,),
                               minval=-lim_out, maxval=lim_out, dtype=jnp.float32)

    out = attention_forward(x, w_qkv, w_out, b_out,
                            num_heads=num_heads, dim_head=dim_head)
    out = jax.block_until_ready(out)

    ref = reference_attention(x, w_qkv, w_out, b_out,
                              num_heads=num_heads, dim_head=dim_head)
    assert out.shape == (B, N, dim)
    # Tolerance loosened vs f32 reference: MXU operands are bf16 and the
    # softmax denominator uses the approximate EUP reciprocal.
    err = jnp.max(jnp.abs(out - ref))
    assert jnp.allclose(out, ref, atol=3e-2, rtol=3e-2), (
        f"mismatch vs reference, max abs err {err}")

    print("KERNEL_OK")
</pallas_src>

<mosaic_0001>
module attributes {stable_mosaic.version = 11 : i64} {
  func.func @_linear_kernel(%arg0: i32, %arg1: i32, %arg2: i32, %arg3: memref<16x32xf32, #tpu.memory_space<vmem>>, %arg4: memref<32x192xf32, #tpu.memory_space<vmem>>, %arg5: memref<16x192xf32, #tpu.memory_space<vmem>>, %arg6: memref<16x192xf32, #tpu.memory_space<vmem>>) attributes {dimension_semantics = [#tpu.dimension_semantics<parallel>, #tpu.dimension_semantics<parallel>, #tpu.dimension_semantics<arbitrary>], iteration_bounds = array<i64: 1, 1, 1>, scalar_prefetch = 0 : i64, scratch_operands = 1 : i64, tpu.core_type = #tpu.core_type<tc>, window_params = [{transform_indices = @transform_0, window_bounds = array<i64: 16, 32>}, {transform_indices = @transform_1, window_bounds = array<i64: 32, 192>}, {transform_indices = @transform_2, window_bounds = array<i64: 16, 192>}]} {
    %c0_i32 = arith.constant 0 : i32
    %0 = arith.cmpi eq, %arg2, %c0_i32 : i32
    %1 = arith.extui %0 : i1 to i32
    %c0_i32_0 = arith.constant 0 : i32
    %2 = arith.cmpi ne, %1, %c0_i32_0 : i32
    scf.if %2 {
      %cst_10 = arith.constant 0.000000e+00 : f32
      %14 = vector.broadcast %cst_10 : f32 to vector<16x192xf32>
      %c0_11 = arith.constant 0 : index
      %c0_12 = arith.constant 0 : index
      %15 = vector.load %arg6[%c0_11, %c0_12] : memref<16x192xf32, #tpu.memory_space<vmem>>, vector<16x192xf32>
      tpu.vector_store %arg6[%c0_11, %c0_12], %14 {strides = array<i32>} : memref<16x192xf32, #tpu.memory_space<vmem>>, vector<16x192xf32>,
    } else {
    }
    %c0 = arith.constant 0 : index
    %c0_1 = arith.constant 0 : index
    %3 = vector.load %arg6[%c0, %c0_1] : memref<16x192xf32, #tpu.memory_space<vmem>>, vector<16x192xf32>
    %c0_2 = arith.constant 0 : index
    %c0_3 = arith.constant 0 : index
    %4 = vector.load %arg3[%c0_2, %c0_3] : memref<16x32xf32, #tpu.memory_space<vmem>>, vector<16x32xf32>
    %5 = arith.truncf %4 : vector<16x32xf32> to vector<16x32xbf16>
    %c0_4 = arith.constant 0 : index
    %c0_5 = arith.constant 0 : index
    %6 = vector.load %arg4[%c0_4, %c0_5] : memref<32x192xf32, #tpu.memory_space<vmem>>, vector<32x192xf32>
    %7 = arith.truncf %6 : vector<32x192xf32> to vector<32x192xbf16>
    %cst = arith.constant dense<0.000000e+00> : vector<16x192xf32>
    %8 = tpu.matmul %5, %7, %cst {dimension_numbers = #tpu.dot_dimension_numbers<[1], [0], [0], [1], [0, 0, 1, 1], [], []>} : vector<16x32xbf16>, vector<32x192xbf16>, vector<16x192xf32> -> vector<16x192xf32>
    %9 = arith.addf %3, %8 : vector<16x192xf32>
    %c0_6 = arith.constant 0 : index
    %c0_7 = arith.constant 0 : index
    %10 = vector.load %arg6[%c0_6, %c0_7] : memref<16x192xf32, #tpu.memory_space<vmem>>, vector<16x192xf32>
    tpu.vector_store %arg6[%c0_6, %c0_7], %9 {strides = array<i32>} : memref<16x192xf32, #tpu.memory_space<vmem>>, vector<16x192xf32>,
    %c0_i32_8 = arith.constant 0 : i32
    %11 = arith.cmpi eq, %arg2, %c0_i32_8 : i32
    %12 = arith.extui %11 : i1 to i32
    %c0_i32_9 = arith.constant 0 : i32
    %13 = arith.cmpi ne, %12, %c0_i32_9 : i32
    scf.if %13 {
      %c0_10 = arith.constant 0 : index
      %c0_11 = arith.constant 0 : index
      %14 = vector.load %arg6[%c0_10, %c0_11] : memref<16x192xf32, #tpu.memory_space<vmem>>, vector<16x192xf32>
      %c0_12 = arith.constant 0 : index
      %c0_13 = arith.constant 0 : index
      %15 = vector.load %arg5[%c0_12, %c0_13] : memref<16x192xf32, #tpu.memory_space<vmem>>, vector<16x192xf32>
      tpu.vector_store %arg5[%c0_12, %c0_13], %14 {strides = array<i32>} : memref<16x192xf32, #tpu.memory_space<vmem>>, vector<16x192xf32>,
    } else {
    }
    return
  }
  func.func @transform_0(%arg0: i32, %arg1: i32, %arg2: i32) -> (i32, i32) {
    %c0_i32 = arith.constant 0 : i32
    return %arg1, %arg2 : i32, i32
  }
  func.func @transform_1(%arg0: i32, %arg1: i32, %arg2: i32) -> (i32, i32) {
    %c0_i32 = arith.constant 0 : i32
    return %arg2, %arg0 : i32, i32
  }
  func.func @transform_2(%arg0: i32, %arg1: i32, %arg2: i32) -> (i32, i32) {
    %c0_i32 = arith.constant 0 : i32
    return %arg1, %arg0 : i32, i32
  }
}

</mosaic_0001>

<llo_original>
// kernel: tpu_custom_call.1
$region0: #{tpu_custom_call.1}
  #allocation0 [shape = 'u32[]', space=smem, size = 0x4, offset = 0x4, fixed_abs, tag = 'smem constant byte address 0x4 - core index']
  #allocation1 [shape = 'u32[72,128]{1,0:T(1,128)}', space=vmem, size = 0x9000, scoped, tag = 'internal scratch']
  #allocation2 [shape = 'f32[16,192]{1,0:T(8,128)}', space=vmem, size = 0x4000, scoped, tag = 'scratch operand']
  %s0 = inlined_call_operand.hbm [shape: f32[16,32], index: 0, kind: input, shape index: {}]
  %s1 = inlined_call_operand.hbm [shape: f32[32,192], index: 1, kind: input, shape index: {}]
  %s2 = inlined_call_operand.hbm [shape: f32[16,192], index: 2, kind: output, shape index: {}]
  %s3 = sld [smem:[#allocation0]]
  $region34: #{tpu_custom_call.1} parent=0
    _
  %s5 = ssub.s32 1, %s3
  %s6 = scalar_select 0, %s5, %s3
  $region1: #{tpu_custom_call.1} parent=0
    #allocation3 [shape = 'u8[8192]{0}', space=vmem, size = 0x2000, scoped, tag = 'input window, operand 0, single buffered']
    #allocation4 [shape = 's32[1]{0}', space=sflag, size = 0x4, scoped, tag = 'scoped memory for tpu_custom_call.1']
    #allocation5 [shape = 's32[1]{0}', space=sflag, size = 0x4, scoped, tag = 'scoped memory for tpu_custom_call.1']
    #allocation6 [shape = 'u8[32768]{0}', space=vmem, size = 0x8000, scoped, tag = 'input window, operand 1, single buffered']
    #allocation7 [shape = 's32[1]{0}', space=sflag, size = 0x4, scoped, tag = 'scoped memory for tpu_custom_call.1']
    #allocation8 [shape = 'u8[16384]{0}', space=vmem, size = 0x4000, scoped, tag = 'output window, operand 0, single buffered']
    %7 = vsyncpa [#allocation4], 0
    %8 = vsyncpa [#allocation7], 0
    %9 = vsyncpa [#allocation5], 0
    // Predicated region
    $region2: #{tpu_custom_call.1} parent=1 // pred_check
      _
    $region3: #{tpu_custom_call.1} parent=1 // pred_check_branch
      %11 = sbr.rel (0) target = $region5
    $region4: #{tpu_custom_call.1} parent=1 // pred_region
      %13 = vsyncadd [#allocation4], 0
      %s14 = sshll.u32 %s0, 4
      %s15 = int_to_ptr.hbm [resolvable:$true] %s14
      %s16 = sshll.u32 [#allocation3], 4
      %s17 = int_to_ptr.vmem [resolvable:$true] %s16
      %22 = dma.hbm_to_vmem [thread:$0]  %s15, 256, %s17, [#allocation4], 128, 128, 8
    $region5: #{tpu_custom_call.1} parent=1 // pred_fallthru
      _
    // Predicated region
    $region6: #{tpu_custom_call.1} parent=1 // pred_check
      _
    $region7: #{tpu_custom_call.1} parent=1 // pred_check_branch
      %24 = sbr.rel (0) target = $region9
    $region8: #{tpu_custom_call.1} parent=1 // pred_region
      %26 = vsyncadd [#allocation7], 0
      %s27 = sshll.u32 %s1, 4
      %s28 = int_to_ptr.hbm [resolvable:$true] %s27
      %s29 = sshll.u32 [#allocation6], 4
      %s30 = int_to_ptr.vmem [resolvable:$true] %s29
      %35 = dma.hbm_to_vmem [thread:$0]  %s28, 1024, %s30, [#allocation7], 256, 256, 16
    $region9: #{tpu_custom_call.1} parent=1 // pred_fallthru
      _
    // Predicated region
    $region10: #{tpu_custom_call.1} parent=1 // pred_check
      _
    $region11: #{tpu_custom_call.1} parent=1 // pred_check_branch
      %37 = sbr.rel (0) target = $region13
    $region12: #{tpu_custom_call.1} parent=1 // pred_region
      %39 = dma.done [#allocation4], 256
    $region13: #{tpu_custom_call.1} parent=1 // pred_fallthru
      _
    // Predicated region
    $region14: #{tpu_custom_call.1} parent=1 // pred_check
      _
    $region15: #{tpu_custom_call.1} parent=1 // pred_check_branch
      %41 = sbr.rel (0) target = $region17
    $region16: #{tpu_custom_call.1} parent=1 // pred_region
      %43 = dma.done [#allocation7], 1024
    $region17: #{tpu_custom_call.1} parent=1 // pred_fallthru
      _
    %p45 = scmp.eq.s32.totalorder 0, 0
    // Predicated region
    $region18: #{tpu_custom_call.1} parent=1 // pred_check
      %p46 = pneg %p45
    $region19: #{tpu_custom_call.1} parent=1 // pred_check_branch
      %48 = sbr.rel (%p46) target = $region21
    $region20: #{tpu_custom_call.1} parent=1 // pred_region
      %49 = vst [vmem:[#allocation2] sm:$0xff] 0.0
      %vm50 = vcmask 523264
      %51 = vst.msk [vmem:[#allocation2 + $0x8] sm:$0xff] %vm50, 0.0
      %52 = vst [vmem:[#allocation2 + $0x10] sm:$0xff] 0.0
      %53 = vst.msk [vmem:[#allocation2 + $0x18] sm:$0xff] %vm50, 0.0
    $region21: #{tpu_custom_call.1} parent=1 // pred_fallthru
      _
    %v54 = vld [vmem:[#allocation2] sm:$0xff]
    %v55 = vld [vmem:[#allocation2 + $0x8] sm:$0xff]
    %v56 = vld [vmem:[#allocation2 + $0x10] sm:$0xff]
    %v57 = vld [vmem:[#allocation2 + $0x18] sm:$0xff]
    %v58 = vld [vmem:[#allocation3] sm:$0xff]
    %v59 = vld [vmem:[#allocation3 + $0x8] sm:$0xff]
    %v60 = vpack.c.bf16 %v59, %v58
    %v61 = vld [vmem:[#allocation6] sm:$0xff]
    %v62 = vld [vmem:[#allocation6 + $0x8] sm:$0xff]
    %v63 = vld [vmem:[#allocation6 + $0x10] sm:$0xff]
    %v64 = vld [vmem:[#allocation6 + $0x18] sm:$0xff]
    %v65 = vld [vmem:[#allocation6 + $0x20] sm:$0xff]
    %v66 = vld [vmem:[#allocation6 + $0x28] sm:$0xff]
    %v67 = vld [vmem:[#allocation6 + $0x30] sm:$0xff]
    %v68 = vld [vmem:[#allocation6 + $0x38] sm:$0xff]
    %v69 = vpack.c.bf16 %v63, %v61
    %v70 = vpack.c.bf16 %v64, %v62
    %v71 = vpack.c.bf16 %v67, %v65
    %v72 = vpack.c.bf16 %v68, %v66
    %vm73 = vcmask 261120
    %v75 = vsel %vm73, %v60, 0
    %77 = vmatpush.bf16.msra.mxu0 0
    %78 = vmatpush.bf16.msra.mxu0 0
    %79 = vmatpush.bf16.msra.mxu0 0
    %80 = vmatpush.bf16.msra.mxu0 0
    %81 = vmatpush.bf16.msra.mxu0 0
    %82 = vmatpush.bf16.msra.mxu0 0
    %83 = vmatpush.bf16.msra.mxu0 %v71
    %84 = vmatpush.bf16.msra.mxu0 %v69
    %85 = vmatmul.bf16.gmra.mxu0 %v75
    %v86 = vpop.f32.mrf.mxu0
    %v87 = vadd.f32 0.0, %v86
    %v88 = vpop.f32.mrf.mxu0
    %v89 = vadd.f32 0.0, %v88
    %90 = vdwg.mxu0
    %91 = vmatpush.bf16.msra.mxu0 0
    %92 = vmatpush.bf16.msra.mxu0 0
    %93 = vmatpush.bf16.msra.mxu0 0
    %94 = vmatpush.bf16.msra.mxu0 0
    %95 = vmatpush.bf16.msra.mxu0 0
    %96 = vmatpush.bf16.msra.mxu0 0
    %97 = vmatpush.bf16.msra.mxu0 %v72
    %98 = vmatpush.bf16.msra.mxu0 %v70
    %99 = vmatmul.bf16.gmra.mxu0 %v75
    %v100 = vpop.f32.mrf.mxu0
    %v101 = vadd.f32 0.0, %v100
    %v102 = vpop.f32.mrf.mxu0
    %v103 = vadd.f32 0.0, %v102
    %104 = vdwg.mxu0
    %v105 = vadd.f32 %v54, %v87
    %v106 = vadd.f32 %v55, %v101
    %v107 = vadd.f32 %v56, %v89
    %v108 = vadd.f32 %v57, %v103
    %109 = vst [vmem:[#allocation2] sm:$0xff] %v105
    %vm110 = vcmask 523264
    %111 = vst.msk [vmem:[#allocation2 + $0x8] sm:$0xff] %vm110, %v106
    %112 = vst [vmem:[#allocation2 + $0x10] sm:$0xff] %v107
    %113 = vst.msk [vmem:[#allocation2 + $0x18] sm:$0xff] %vm110, %v108
    // Predicated region
    $region22: #{tpu_custom_call.1} parent=1 // pred_check
      %p114 = pneg %p45
    $region23: #{tpu_custom_call.1} parent=1 // pred_check_branch
      %116 = sbr.rel (%p114) target = $region25
    $region24: #{tpu_custom_call.1} parent=1 // pred_region
      %v117 = vld [vmem:[#allocation2] sm:$0xff]
      %v118 = vld [vmem:[#allocation2 + $0x8] sm:$0xff]
      %v119 = vld [vmem:[#allocation2 + $0x10] sm:$0xff]
      %v120 = vld [vmem:[#allocation2 + $0x18] sm:$0xff]
      %121 = vst [vmem:[#allocation8] sm:$0xff] %v117
      %122 = vst.msk [vmem:[#allocation8 + $0x8] sm:$0xff] %vm110, %v118
      %123 = vst [vmem:[#allocation8 + $0x10] sm:$0xff] %v119
      %124 = vst.msk [vmem:[#allocation8 + $0x18] sm:$0xff] %vm110, %v120
    $region25: #{tpu_custom_call.1} parent=1 // pred_fallthru
      _
    // Predicated region
    $region26: #{tpu_custom_call.1} parent=1 // pred_check
      _
    $region27: #{tpu_custom_call.1} parent=1 // pred_check_branch
      %126 = sbr.rel (0) target = $region29
    $region28: #{tpu_custom_call.1} parent=1 // pred_region
      %128 = vsyncadd [#allocation5], 0
      %s129 = sshll.u32 [#allocation8], 4
      %s130 = int_to_ptr.vmem [resolvable:$true] %s129
      %s131 = sshll.u32 %s2, 4
      %s132 = int_to_ptr.hbm [resolvable:$true] %s131
      %137 = dma.vmem_to_hbm [thread:$0]  %s130, 512, %s132, [#allocation5], 256, 256, 16
    $region29: #{tpu_custom_call.1} parent=1 // pred_fallthru
      _
    // Predicated region
    $region30: #{tpu_custom_call.1} parent=1 // pred_check
      _
    $region31: #{tpu_custom_call.1} parent=1 // pred_check_branch
      %139 = sbr.rel (0) target = $region33
    $region32: #{tpu_custom_call.1} parent=1 // pred_region
      %141 = dma.done [#allocation5], 512
    $region33: #{tpu_custom_call.1} parent=1 // pred_fallthru
      _
    %142 = vsyncpa [#allocation4], 1
    %143 = vsyncpa [#allocation7], 1
    %144 = vsyncpa [#allocation5], 1

</llo_original>
